<compile_context>
chip_gen: v7x
topology: tpu7x:2x2x1
jax: 0.10.0
libtpu: 0.0.40
codegen_flags: <defaults>
</compile_context>

<pallas_src>
import jax
import jax.numpy as jnp
from jax.experimental import pallas as pl
from jax.experimental.pallas import tpu as pltpu

LANE = 128
_MAX_BLOCK_BYTES = 2 << 20      # ~1-2 MiB blocks sit at ~85% of the HBM roofline
_MIN_BLOCK_BYTES = 512 << 10    # never shrink below this; chunk copies instead
_TINY_BYPASS_BYTES = 128 << 10  # below this, plain XLA / alias copies are cheaper


def _replicate_kernel(x_ref, *o_refs):
    # Load the block once from VMEM, store it to every output block.
    v = x_ref[...]
    for o_ref in o_refs:
        o_ref[...] = v


def _vmem_budget_bytes() -> int:
    """Pipeline VMEM budget derived from the chip's physical VMEM (with headroom)."""
    phys = 64 << 20  # conservative default (v7x per-TC VMEM) if the query fails
    try:
        phys = int(pltpu.get_tpu_info().vmem_capacity_bytes)
    except Exception:
        pass
    # ~25% headroom; 128 MiB chips (v5e/v6e) -> 96 MiB, 64 MiB chips (v7x) -> 48 MiB.
    return min(phys * 3 // 4, 96 << 20)


def _sublane_multiple(dtype) -> int:
    # Native tile second-to-last dim: 8 (f32), 16 (bf16/f16), 32 (int8/fp8).
    return max(8, 32 // jnp.dtype(dtype).itemsize)


def _two_d_view(x):
    """Pick a lane-dense 2D view (rows, cols) of x."""
    total = int(x.size)
    if total % LANE == 0:
        return total // LANE, LANE
    # Fallback: fold trailing dims until a row is >= 512 bytes (no 128-multiple
    # suffix product can exist here since total itself isn't a multiple of 128).
    itemsize = jnp.dtype(x.dtype).itemsize
    cols = 1
    for d in reversed(x.shape):
        cols *= int(d)
        if cols * itemsize >= 512:
            break
    return total // cols, cols


def _make_copies(x2, n_copies, *, budget, block_bytes_override=None):
    """One fused pallas_call producing `n_copies` independent copies of 2D `x2`."""
    rows, cols = int(x2.shape[0]), int(x2.shape[1])
    itemsize = jnp.dtype(x2.dtype).itemsize
    total_bytes = rows * cols * itemsize

    if block_bytes_override is not None:
        block_bytes = int(block_bytes_override)
    else:
        # 1 input + n_copies outputs, each double-buffered by the pipeline.
        block_bytes = min(_MAX_BLOCK_BYTES, budget // (2 * (n_copies + 1)))
        block_bytes = max(block_bytes, 128 << 10)

    sub = _sublane_multiple(x2.dtype)
    bytes_per_row = cols * itemsize
    target_rows = max(1, block_bytes // bytes_per_row)

    if target_rows >= rows or rows <= sub:
        block_rows = rows  # full second-to-last dim: always a legal block
    else:
        block_rows = max(sub, (min(target_rows, rows) // sub) * sub)

    # Ensure >= 2 grid steps for non-tiny tensors so "parallel" can use both of
    # v7x's TensorCores (and halves the per-core working set). No cost on v5e/v6e.
    if block_rows >= rows and total_bytes > (1 << 20) and rows > sub:
        half = -(-rows // 2)            # ceil(rows / 2)
        half = -(-half // sub) * sub    # round up to the native sublane multiple
        if half < rows:
            block_rows = half

    grid = (pl.cdiv(rows, block_rows),)

    outs = pl.pallas_call(
        _replicate_kernel,
        out_shape=tuple(
            jax.ShapeDtypeStruct((rows, cols), x2.dtype) for _ in range(n_copies)
        ),
        grid=grid,
        in_specs=[pl.BlockSpec((block_rows, cols), lambda i: (i, 0))],
        out_specs=tuple(
            pl.BlockSpec((block_rows, cols), lambda i: (i, 0))
            for _ in range(n_copies)
        ),
        compiler_params=pltpu.CompilerParams(
            dimension_semantics=("parallel",),
            vmem_limit_bytes=int(budget),
        ),
        cost_estimate=pl.CostEstimate(
            flops=0,
            transcendentals=0,
            bytes_accessed=(n_copies + 1) * total_bytes,
        ),
    )(x2)
    return list(outs)


def replicate_pallas(
    x: jax.Array,
    num_times: int,
    *,
    reuse_input: bool = True,
    block_bytes: int | None = None,
    min_pallas_bytes: int = _TINY_BYPASS_BYTES,
):
    """Return a list of `num_times` copies of `x` (fused Pallas copy kernel).

    reuse_input=True returns `x` itself as copy 0 (observationally identical to
    .clone() under JAX immutability) and materializes only num_times-1 copies.
    """
    num_times = int(num_times)
    assert num_times >= 0
    if num_times == 0:
        return []

    orig_shape = x.shape
    total = int(x.size)
    assert total > 0, "empty tensors not supported"
    itemsize = jnp.dtype(x.dtype).itemsize
    total_bytes = total * itemsize

    n_kernel_copies = num_times - 1 if reuse_input else num_times
    if n_kernel_copies == 0:
        return [x]

    # Tiny-tensor bypass: kernel-launch + per-step overhead dominates; aliases are
    # indistinguishable from copies for immutable JAX arrays.
    if reuse_input and total_bytes < min_pallas_bytes:
        return [x] * num_times

    rows, cols = _two_d_view(x)
    x2 = x.reshape(rows, cols)
    budget = _vmem_budget_bytes()

    # Chunk outputs for very large num_times so blocks never fall below
    # _MIN_BLOCK_BYTES (one extra input read per extra group, ~free vs tiny blocks).
    if block_bytes is None:
        max_copies_per_call = max(1, budget // (2 * _MIN_BLOCK_BYTES) - 1)
    else:
        max_copies_per_call = n_kernel_copies  # caller pinned the block size

    copies = []
    remaining = n_kernel_copies
    while remaining > 0:
        g = min(remaining, max_copies_per_call)
        copies.extend(
            _make_copies(x2, g, budget=budget, block_bytes_override=block_bytes)
        )
        remaining -= g

    outs = [c.reshape(orig_shape) for c in copies]
    if reuse_input:
        outs = [x] + outs
    return outs


class Replicate:
    """JAX/Pallas equivalent of the PyTorch Replicate module (no parameters)."""

    def __init__(self, num_times: int):
        self.num_times = int(num_times)

    def __call__(self, x: jax.Array):
        return replicate_pallas(x, self.num_times)

    def __repr__(self):
        return f"Replicate(num_times={self.num_times})"


if __name__ == "__main__":
    root = jax.random.PRNGKey(0)
    k0, k1, k2, k3 = jax.random.split(root, 4)
    ok = True

    def check(outs, x, n):
        good = len(outs) == n
        for o in outs:
            o = jax.block_until_ready(o)
            good &= (o.shape == x.shape) and (o.dtype == x.dtype)
            good &= bool(jnp.array_equal(o, x))
        return good

    # 1) Main case (forced through the kernel): 2048 elems -> lane-dense (16,128).
    x = jax.random.normal(k0, (2, 4, 16, 16), dtype=jnp.float32)
    ok &= check(replicate_pallas(x, 3, min_pallas_bytes=0), x, 3)

    # 2) Non-128-multiple fallback: trailing dims folded into a single wide row.
    x_odd = jax.random.normal(k1, (3, 5, 7), dtype=jnp.float32)
    ok &= check(replicate_pallas(x_odd, 2, min_pallas_bytes=0), x_odd, 2)

    # 3) Forced multi-block grid (tiny block_bytes) incl. a partial last block.
    x_tile = jax.random.normal(k2, (9, 128), dtype=jnp.float32)
    ok &= check(replicate_pallas(x_tile, 3, block_bytes=2048, min_pallas_bytes=0),
                x_tile, 3)

    # 4) bf16 path (dtype-aware sublane rounding) + strict materialization of all
    #    copies (reuse_input=False, i.e. the kernel writes every output).
    x_bf = jax.random.normal(k3, (4, 64, 128), dtype=jnp.bfloat16)
    ok &= check(replicate_pallas(x_bf, 2, reuse_input=False, min_pallas_bytes=0),
                x_bf, 2)

    # 5) Default path on a small tensor: tiny-tensor bypass (no kernel launch).
    ok &= check(Replicate(num_times=4)(x), x, 4)

    assert ok, "Pallas Replicate mismatch vs input"
    print("KERNEL_OK")
</pallas_src>

<mosaic_0001>
module attributes {stable_mosaic.version = 11 : i64} {
  func.func @_replicate_kernel(%arg0: i32, %arg1: memref<16x128xf32, #tpu.memory_space<vmem>>, %arg2: memref<16x128xf32, #tpu.memory_space<vmem>>, %arg3: memref<16x128xf32, #tpu.memory_space<vmem>>) attributes {dimension_semantics = [#tpu.dimension_semantics<parallel>], iteration_bounds = array<i64: 1>, scalar_prefetch = 0 : i64, scratch_operands = 0 : i64, tpu.core_type = #tpu.core_type<tc>, window_params = [{transform_indices = @transform_0, window_bounds = array<i64: 16, 128>}, {transform_indices = @transform_1, window_bounds = array<i64: 16, 128>}, {transform_indices = @transform_2, window_bounds = array<i64: 16, 128>}]} {
    %c0 = arith.constant 0 : index
    %c0_0 = arith.constant 0 : index
    %0 = vector.load %arg1[%c0, %c0_0] : memref<16x128xf32, #tpu.memory_space<vmem>>, vector<16x128xf32>
    %c0_1 = arith.constant 0 : index
    %c0_2 = arith.constant 0 : index
    %1 = vector.load %arg2[%c0_1, %c0_2] : memref<16x128xf32, #tpu.memory_space<vmem>>, vector<16x128xf32>
    tpu.vector_store %arg2[%c0_1, %c0_2], %0 {strides = array<i32>} : memref<16x128xf32, #tpu.memory_space<vmem>>, vector<16x128xf32>,
    %c0_3 = arith.constant 0 : index
    %c0_4 = arith.constant 0 : index
    %2 = vector.load %arg3[%c0_3, %c0_4] : memref<16x128xf32, #tpu.memory_space<vmem>>, vector<16x128xf32>
    tpu.vector_store %arg3[%c0_3, %c0_4], %0 {strides = array<i32>} : memref<16x128xf32, #tpu.memory_space<vmem>>, vector<16x128xf32>,
    return
  }
  func.func @transform_0(%arg0: i32) -> (i32, i32) {
    %c0_i32 = arith.constant 0 : i32
    %c0_i32_0 = arith.constant 0 : i32
    return %arg0, %c0_i32 : i32, i32
  }
  func.func @transform_1(%arg0: i32) -> (i32, i32) {
    %c0_i32 = arith.constant 0 : i32
    %c0_i32_0 = arith.constant 0 : i32
    return %arg0, %c0_i32 : i32, i32
  }
  func.func @transform_2(%arg0: i32) -> (i32, i32) {
    %c0_i32 = arith.constant 0 : i32
    %c0_i32_0 = arith.constant 0 : i32
    return %arg0, %c0_i32 : i32, i32
  }
}

</mosaic_0001>

<llo_original>
// kernel: tpu_custom_call.1
$region0: #{tpu_custom_call.1}
  #allocation0 [shape = 'u32[]', space=smem, size = 0x4, offset = 0x4, fixed_abs, tag = 'smem constant byte address 0x4 - core index']
  #allocation1 [shape = 'u32[144,128]{1,0:T(1,128)}', space=vmem, size = 0x12000, scoped, tag = 'internal scratch']
  %s0 = inlined_call_operand.hbm [shape: f32[16,128], index: 0, kind: input, shape index: {}]
  %s1 = inlined_call_operand.hbm [shape: f32[16,128], index: 1, kind: output, shape index: {0}]
  %s2 = inlined_call_operand.hbm [shape: f32[16,128], index: 2, kind: output, shape index: {1}]
  %3 = xla_tuple %s1, %s2
  %s4 = sld [smem:[#allocation0]]
  $region26: #{tpu_custom_call.1} parent=0
    _
  %s6 = ssub.s32 1, %s4
  %s7 = scalar_select 0, %s6, %s4
  $region1: #{tpu_custom_call.1} parent=0
    #allocation2 [shape = 'u8[8192]{0}', space=vmem, size = 0x2000, scoped, tag = 'input window, operand 0, single buffered']
    #allocation3 [shape = 's32[1]{0}', space=sflag, size = 0x4, scoped, tag = 'scoped memory for tpu_custom_call.1']
    #allocation4 [shape = 's32[1]{0}', space=sflag, size = 0x4, scoped, tag = 'scoped memory for tpu_custom_call.1']
    #allocation5 [shape = 'u8[8192]{0}', space=vmem, size = 0x2000, scoped, tag = 'output window, operand 0, single buffered']
    #allocation6 [shape = 'u8[8192]{0}', space=vmem, size = 0x2000, scoped, tag = 'output window, operand 1, single buffered']
    #allocation7 [shape = 's32[1]{0}', space=sflag, size = 0x4, scoped, tag = 'scoped memory for tpu_custom_call.1']
    %8 = vsyncpa [#allocation3], 0
    %9 = vsyncpa [#allocation4], 0
    %10 = vsyncpa [#allocation7], 0
    // Predicated region
    $region2: #{tpu_custom_call.1} parent=1 // pred_check
      _
    $region3: #{tpu_custom_call.1} parent=1 // pred_check_branch
      %12 = sbr.rel (0) target = $region5
    $region4: #{tpu_custom_call.1} parent=1 // pred_region
      %s14 = ssub.s32 256, 256
      %15 = vsyncadd [#allocation3], %s14
      %s16 = sshll.u32 [#allocation2], 4
      %s17 = int_to_ptr.vmem [resolvable:$true] %s16
      %22 = dma.hbm_to_vmem [thread:$0]  %s0, 256, %s17, [#allocation3], 128, 128, 8
    $region5: #{tpu_custom_call.1} parent=1 // pred_fallthru
      _
    // Predicated region
    $region6: #{tpu_custom_call.1} parent=1 // pred_check
      _
    $region7: #{tpu_custom_call.1} parent=1 // pred_check_branch
      %24 = sbr.rel (0) target = $region9
    $region8: #{tpu_custom_call.1} parent=1 // pred_region
      %25 = dma.done [#allocation3], 256
    $region9: #{tpu_custom_call.1} parent=1 // pred_fallthru
      _
    %v26 = vld [vmem:[#allocation2] sm:$0xff]
    %v27 = vld [vmem:[#allocation2 + $0x8] sm:$0xff]
    %28 = vst [vmem:[#allocation5] sm:$0xff] %v26
    %29 = vst [vmem:[#allocation5 + $0x8] sm:$0xff] %v27
    %30 = vst [vmem:[#allocation6] sm:$0xff] %v26
    %31 = vst [vmem:[#allocation6 + $0x8] sm:$0xff] %v27
    // Predicated region
    $region10: #{tpu_custom_call.1} parent=1 // pred_check
      _
    $region11: #{tpu_custom_call.1} parent=1 // pred_check_branch
      %33 = sbr.rel (0) target = $region13
    $region12: #{tpu_custom_call.1} parent=1 // pred_region
      %s35 = ssub.s32 256, 256
      %36 = vsyncadd [#allocation4], %s35
      %s37 = sshll.u32 [#allocation5], 4
      %s38 = int_to_ptr.vmem [resolvable:$true] %s37
      %43 = dma.vmem_to_hbm [thread:$0]  %s38, 256, %s1, [#allocation4], 128, 128, 8
    $region13: #{tpu_custom_call.1} parent=1 // pred_fallthru
      _
    // Predicated region
    $region14: #{tpu_custom_call.1} parent=1 // pred_check
      _
    $region15: #{tpu_custom_call.1} parent=1 // pred_check_branch
      %45 = sbr.rel (0) target = $region17
    $region16: #{tpu_custom_call.1} parent=1 // pred_region
      %s47 = ssub.s32 256, 256
      %48 = vsyncadd [#allocation7], %s47
      %s49 = sshll.u32 [#allocation6], 4
      %s50 = int_to_ptr.vmem [resolvable:$true] %s49
      %55 = dma.vmem_to_hbm [thread:$0]  %s50, 256, %s2, [#allocation7], 128, 128, 8
    $region17: #{tpu_custom_call.1} parent=1 // pred_fallthru
      _
    // Predicated region
    $region18: #{tpu_custom_call.1} parent=1 // pred_check
      _
    $region19: #{tpu_custom_call.1} parent=1 // pred_check_branch
      %57 = sbr.rel (0) target = $region21
    $region20: #{tpu_custom_call.1} parent=1 // pred_region
      %58 = dma.done [#allocation4], 256
    $region21: #{tpu_custom_call.1} parent=1 // pred_fallthru
      _
    // Predicated region
    $region22: #{tpu_custom_call.1} parent=1 // pred_check
      _
    $region23: #{tpu_custom_call.1} parent=1 // pred_check_branch
      %60 = sbr.rel (0) target = $region25
    $region24: #{tpu_custom_call.1} parent=1 // pred_region
      %61 = dma.done [#allocation7], 256
    $region25: #{tpu_custom_call.1} parent=1 // pred_fallthru
      _
    %62 = vsyncpa [#allocation3], 1
    %63 = vsyncpa [#allocation4], 1
    %64 = vsyncpa [#allocation7], 1

</llo_original>
